<compile_context>
chip_gen: v5e
topology: v5e:2x2
jax: 0.10.0
libtpu: 0.0.40
codegen_flags: <defaults>
</compile_context>

<pallas_src>
import jax
import jax.numpy as jnp
from jax.experimental import pallas as pl
from jax.experimental.pallas import tpu as pltpu


def multi_linear_map_kernel(f_ref, g_ref, out_ref):
    # f_ref:   (block_b, F)
    # g_ref:   (block_b, C)
    # out_ref: (block_b, C * F)
    f = f_ref[...]                                   # (tb, F)
    g = g_ref[...]                                   # (tb, C)
    tb = f.shape[0]
    C = g.shape[1]
    F = f.shape[1]

    # Per-sample outer product on the VPU (no K=1 MXU matmuls).
    outer = g[:, :, None] * f[:, None, :]            # (tb, C, F)

    # Flatten (C, F) -> C*F so the store is lane-dense (last dim = C*F).
    out_ref[...] = outer.reshape(tb, C * F).astype(out_ref.dtype)


def multi_linear_map(f, g, *, block_b=None):
    """f: (B, F), g: (B, C)  ->  (B, C * F), matching MultiLinearMap.forward."""
    B, F = f.shape
    B2, C = g.shape
    assert B == B2, "f and g must share the batch dimension"

    # Pick a batch tile: prefer a multiple of 8 (sublane), else take the whole
    # (tiny) batch as a single full-extent block.
    if block_b is None:
        block_b = 8 if (B % 8 == 0) else B
    assert B % block_b == 0
    grid = (B // block_b,)

    out = pl.pallas_call(
        multi_linear_map_kernel,
        out_shape=jax.ShapeDtypeStruct((B, C * F), f.dtype),
        grid=grid,
        in_specs=[
            pl.BlockSpec((block_b, F), lambda i: (i, 0)),
            pl.BlockSpec((block_b, C), lambda i: (i, 0)),
        ],
        out_specs=pl.BlockSpec((block_b, C * F), lambda i: (i, 0)),
        compiler_params=pltpu.CompilerParams(
            # Batch axis is embarrassingly parallel -> megacore split on v7x.
            dimension_semantics=("parallel",)),
    )(f, g)
    return out


def reference_forward(f, g):
    # torch.bmm(g.unsqueeze(2), f.unsqueeze(1)).view(B, -1)
    B = f.shape[0]
    return (g[:, :, None] * f[:, None, :]).reshape(B, -1)


if __name__ == "__main__":
    # Shapes implied by the module: f (minibatch, F), g (minibatch, C).
    # batch=2, F=32 (hidden), C=4 (e.g. num classes / channels).
    B, F, C = 2, 32, 4

    key = jax.random.PRNGKey(0)
    kf, kg = jax.random.split(key, 2)
    f = jax.random.normal(kf, (B, F), jnp.float32)
    g = jax.random.normal(kg, (B, C), jnp.float32)

    out = multi_linear_map(f, g)
    jax.block_until_ready(out)

    out_ref = reference_forward(f, g)
    assert out.shape == (B, C * F)
    assert jnp.allclose(out, out_ref, atol=1e-5, rtol=1e-5)

    print("KERNEL_OK")
</pallas_src>

<mosaic_0001>
module attributes {stable_mosaic.version = 11 : i64} {
  func.func @multi_linear_map_kernel(%arg0: i32, %arg1: memref<2x32xf32, #tpu.memory_space<vmem>>, %arg2: memref<2x4xf32, #tpu.memory_space<vmem>>, %arg3: memref<2x128xf32, #tpu.memory_space<vmem>>) attributes {dimension_semantics = [#tpu.dimension_semantics<parallel>], iteration_bounds = array<i64: 1>, scalar_prefetch = 0 : i64, scratch_operands = 0 : i64, tpu.core_type = #tpu.core_type<tc>, window_params = [{transform_indices = @transform_0, window_bounds = array<i64: 2, 32>}, {transform_indices = @transform_1, window_bounds = array<i64: 2, 4>}, {transform_indices = @transform_2, window_bounds = array<i64: 2, 128>}]} {
    %c0 = arith.constant 0 : index
    %c0_0 = arith.constant 0 : index
    %0 = vector.load %arg1[%c0, %c0_0] : memref<2x32xf32, #tpu.memory_space<vmem>>, vector<2x32xf32>
    %c0_1 = arith.constant 0 : index
    %c0_2 = arith.constant 0 : index
    %1 = vector.load %arg2[%c0_1, %c0_2] : memref<2x4xf32, #tpu.memory_space<vmem>>, vector<2x4xf32>
    %2 = vector.shape_cast %1 : vector<2x4xf32> to vector<2x4x1xf32>
    %3 = vector.shape_cast %0 : vector<2x32xf32> to vector<2x1x32xf32>
    %4 = vector.broadcast %2 : vector<2x4x1xf32> to vector<2x4x32xf32>
    %5 = vector.broadcast %3 : vector<2x1x32xf32> to vector<2x4x32xf32>
    %6 = arith.mulf %4, %5 : vector<2x4x32xf32>
    %7 = vector.shape_cast %6 : vector<2x4x32xf32> to vector<2x128xf32>
    %c0_3 = arith.constant 0 : index
    %c0_4 = arith.constant 0 : index
    %8 = vector.load %arg3[%c0_3, %c0_4] : memref<2x128xf32, #tpu.memory_space<vmem>>, vector<2x128xf32>
    tpu.vector_store %arg3[%c0_3, %c0_4], %7 {strides = array<i32>} : memref<2x128xf32, #tpu.memory_space<vmem>>, vector<2x128xf32>,
    return
  }
  func.func @transform_0(%arg0: i32) -> (i32, i32) {
    %c0_i32 = arith.constant 0 : i32
    %c0_i32_0 = arith.constant 0 : i32
    return %arg0, %c0_i32 : i32, i32
  }
  func.func @transform_1(%arg0: i32) -> (i32, i32) {
    %c0_i32 = arith.constant 0 : i32
    %c0_i32_0 = arith.constant 0 : i32
    return %arg0, %c0_i32 : i32, i32
  }
  func.func @transform_2(%arg0: i32) -> (i32, i32) {
    %c0_i32 = arith.constant 0 : i32
    %c0_i32_0 = arith.constant 0 : i32
    return %arg0, %c0_i32 : i32, i32
  }
}

</mosaic_0001>

<llo_original>
// kernel: tpu_custom_call.1
$region0: #{tpu_custom_call.1}
  #allocation0 [shape = 'u32[]', space=smem, size = 0x4, offset = 0x4, fixed_abs, tag = 'smem constant byte address 0x4 - core index']
  #allocation1 [shape = 'u32[72,128]{1,0:T(1,128)}', space=vmem, size = 0x9000, scoped, tag = 'internal scratch']
  %s0 = inlined_call_operand.hbm [shape: f32[2,32], index: 0, kind: input, shape index: {}]
  %s1 = inlined_call_operand.hbm [shape: f32[2,4], index: 1, kind: input, shape index: {}]
  %s2 = inlined_call_operand.hbm [shape: f32[2,128], index: 2, kind: output, shape index: {}]
  %s3 = sld [smem:[#allocation0]]
  $region26: #{tpu_custom_call.1} parent=0
    _
  %s5 = ssub.s32 1, %s3
  %s6 = scalar_select 0, %s5, %s3
  $region1: #{tpu_custom_call.1} parent=0
    #allocation2 [shape = 'u8[1024]{0}', space=vmem, size = 0x400, scoped, tag = 'input window, operand 0, single buffered']
    #allocation3 [shape = 's32[1]{0}', space=sflag, size = 0x4, scoped, tag = 'scoped memory for tpu_custom_call.1']
    #allocation4 [shape = 's32[1]{0}', space=sflag, size = 0x4, scoped, tag = 'scoped memory for tpu_custom_call.1']
    #allocation5 [shape = 'u8[1024]{0}', space=vmem, size = 0x400, scoped, tag = 'input window, operand 1, single buffered']
    #allocation6 [shape = 's32[1]{0}', space=sflag, size = 0x4, scoped, tag = 'scoped memory for tpu_custom_call.1']
    #allocation7 [shape = 'u8[1024]{0}', space=vmem, size = 0x400, scoped, tag = 'output window, operand 0, single buffered']
    %7 = vsyncpa [#allocation3], 0
    %8 = vsyncpa [#allocation6], 0
    %9 = vsyncpa [#allocation4], 0
    // Predicated region
    $region2: #{tpu_custom_call.1} parent=1 // pred_check
      _
    $region3: #{tpu_custom_call.1} parent=1 // pred_check_branch
      %11 = sbr.rel (0) target = $region5
    $region4: #{tpu_custom_call.1} parent=1 // pred_region
      %13 = vsyncadd [#allocation3], 0
      %s15 = sshll.u32 %s0, 4
      %s16 = int_to_ptr.hbm [resolvable:$true] %s15
      %s17 = sshll.u32 [#allocation2], 4
      %s18 = int_to_ptr.vmem [resolvable:$true] %s17
      %20 = dma.hbm_to_vmem [thread:$0]  %s16, 32, %s18, [#allocation3]
    $region5: #{tpu_custom_call.1} parent=1 // pred_fallthru
      _
    // Predicated region
    $region6: #{tpu_custom_call.1} parent=1 // pred_check
      _
    $region7: #{tpu_custom_call.1} parent=1 // pred_check_branch
      %22 = sbr.rel (0) target = $region9
    $region8: #{tpu_custom_call.1} parent=1 // pred_region
      %24 = vsyncadd [#allocation6], 0
      %s26 = sshll.u32 %s1, 4
      %s27 = int_to_ptr.hbm [resolvable:$true] %s26
      %s28 = sshll.u32 [#allocation5], 4
      %s29 = int_to_ptr.vmem [resolvable:$true] %s28
      %31 = dma.hbm_to_vmem [thread:$0]  %s27, 32, %s29, [#allocation6]
    $region9: #{tpu_custom_call.1} parent=1 // pred_fallthru
      _
    // Predicated region
    $region10: #{tpu_custom_call.1} parent=1 // pred_check
      _
    $region11: #{tpu_custom_call.1} parent=1 // pred_check_branch
      %33 = sbr.rel (0) target = $region13
    $region12: #{tpu_custom_call.1} parent=1 // pred_region
      %35 = dma.done [#allocation3], 32
    $region13: #{tpu_custom_call.1} parent=1 // pred_fallthru
      _
    // Predicated region
    $region14: #{tpu_custom_call.1} parent=1 // pred_check
      _
    $region15: #{tpu_custom_call.1} parent=1 // pred_check_branch
      %37 = sbr.rel (0) target = $region17
    $region16: #{tpu_custom_call.1} parent=1 // pred_region
      %39 = dma.done [#allocation6], 32
    $region17: #{tpu_custom_call.1} parent=1 // pred_fallthru
      _
    %v40 = vld [vmem:[#allocation2] sm:$0x3]
    %v41 = vld [vmem:[#allocation5] sm:$0x3]
    %v42 = vperm.slane %v41, 0
    %v43 = vlaneseq
    %v44 = vshrl.u32 %v43, 7
    %46 = vset.pattern.permute.xlu0 %v44
    %47 = vperm.xlu0 %46, %v42
    %v48 = vpop.permute.xlu0 %47
    %v49 = vperm.slane %v41, 1
    %v50 = vlaneseq
    %v51 = vshrl.u32 %v50, 7
    %53 = vset.pattern.permute.xlu0 %v51
    %54 = vperm.xlu0 %53, %v49
    %v55 = vpop.permute.xlu0 %54
    %v57 = vrot.slane %v40, 1
    %v58 = vperm.slane %v40, 0
    %v59 = vperm.slane %v57, 0
    %v62 = vmul.f32 %v48, %v58
    %v64 = vunpack.c.l.s4 1983009808
    %v65 = vunpack.c.0.s8 %v64
    %v66 = vperm.slane %v62, %v65
    %v67 = vmul.f32 %v55, %v59
    %v69 = vunpack.c.l.s4 1983009808
    %v70 = vunpack.c.0.s8 %v69
    %v71 = vperm.slane %v67, %v70
    %v72 = vrot.slane %v71, 4
    %vm73 = vcmask 1047556
    %v74 = vsel %vm73, %v72, %v66
    %v75 = vrot.slane %v66, 4
    %v76 = vsel %vm73, %v71, %v75
    %v78 = vunpack.c.l.s4 1934713408
    %v79 = vunpack.c.0.s8 %v78
    %v80 = vperm.slane %v74, %v79
    %v82 = vunpack.c.l.s4 1934713408
    %v83 = vunpack.c.0.s8 %v82
    %v84 = vperm.slane %v76, %v83
    %v85 = vrot.slane %v80, 4
    %v86 = vsel %vm73, 0.0, %v85
    %v87 = vrot.slane %v84, 4
    %v88 = vsel %vm73, 0.0, %v87
    %90 = vrot.lane.b32.xlu0 %v86, 32
    %v91 = vpop.permute.xlu0 %90
    %94 = vrot.lane.b32.xlu0 %v84, 64
    %v95 = vpop.permute.xlu0 %94
    %98 = vrot.lane.b32.xlu0 %v88, 96
    %v99 = vpop.permute.xlu0 %98
    %vm101 = vcmask 261120
    %v102 = vsel %vm101, %v80, %v91
    %vm103 = vcmask 523264
    %v104 = vsel %vm103, %v102, %v95
    %vm105 = vcmask 785408
    %v106 = vsel %vm105, %v104, %v99
    %107 = vst [vmem:[#allocation7] sm:$0x3] %v106
    // Predicated region
    $region18: #{tpu_custom_call.1} parent=1 // pred_check
      _
    $region19: #{tpu_custom_call.1} parent=1 // pred_check_branch
      %109 = sbr.rel (0) target = $region21
    $region20: #{tpu_custom_call.1} parent=1 // pred_region
      %111 = vsyncadd [#allocation4], 0
      %s113 = sshll.u32 [#allocation7], 4
      %s114 = int_to_ptr.vmem [resolvable:$true] %s113
      %s115 = sshll.u32 %s2, 4
      %s116 = int_to_ptr.hbm [resolvable:$true] %s115
      %118 = dma.vmem_to_hbm [thread:$0]  %s114, 32, %s116, [#allocation4]
    $region21: #{tpu_custom_call.1} parent=1 // pred_fallthru
      _
    // Predicated region
    $region22: #{tpu_custom_call.1} parent=1 // pred_check
      _
    $region23: #{tpu_custom_call.1} parent=1 // pred_check_branch
      %120 = sbr.rel (0) target = $region25
    $region24: #{tpu_custom_call.1} parent=1 // pred_region
      %122 = dma.done [#allocation4], 32
    $region25: #{tpu_custom_call.1} parent=1 // pred_fallthru
      _
    %123 = vsyncpa [#allocation3], 1
    %124 = vsyncpa [#allocation6], 1
    %125 = vsyncpa [#allocation4], 1

</llo_original>
